<compile_context>
chip_gen: v7x
topology: tpu7x:2x2x1
jax: 0.10.0
libtpu: 0.0.40
codegen_flags: <defaults>
</compile_context>

<pallas_src>
import functools

import jax
import jax.numpy as jnp
from jax.experimental import pallas as pl
from jax.experimental.pallas import tpu as pltpu


# --------------------------------------------------------------------------
# Kernel
# --------------------------------------------------------------------------
def _apply_activation(h, activation: str):
    if activation == "none":
        return h
    if activation == "relu":
        return jnp.maximum(h, 0.0)
    if activation == "softplus":
        return jax.nn.softplus(h)
    raise ValueError(f"unknown activation: {activation}")


def _mlp_fused_kernel(x_ref, *refs, activation: str, n_layers: int):
    """Fused MLP for one M-tile.

    x_ref:                  (tm, n_in)            VMEM
    refs[2*i], refs[2*i+1]: (K_i, N_i), (1, N_i)  VMEM weight / bias of layer i
    refs[-1]:               (tm, n_out)           VMEM output
    Matmuls accumulate in f32 on the MXU; hidden layers get `activation`, the
    output layer gets none (matches the PyTorch module).
    """
    o_ref = refs[-1]
    h = x_ref[...]
    for i in range(n_layers):
        w = refs[2 * i][...]          # (K_i, N_i)  already transposed to in x out
        b = refs[2 * i + 1][...]      # (1,  N_i)
        h = jnp.dot(h, w, preferred_element_type=jnp.float32) + b
        if i < n_layers - 1:          # no activation on the last layer
            h = _apply_activation(h, activation)
    o_ref[...] = h.astype(o_ref.dtype)


# --------------------------------------------------------------------------
# Parameter handling
# --------------------------------------------------------------------------
def init_mlp_params(key, n_in, n_out, n_hidden=None, n_layers=2,
                    dtype=jnp.float32):
    """Deterministic parameter init matching MLP.__init__ shape logic.

    Returns a list of (W[out,in], b[out]) pairs (PyTorch Linear convention).
    Weights: Xavier-uniform, biases: zeros (schnetpack-style Dense init).
    """
    if n_hidden is None:
        c = n_in
        n_neurons = []
        for _ in range(n_layers):
            n_neurons.append(c)
            c = c // 2
        n_neurons.append(n_out)
    else:
        if isinstance(n_hidden, int):
            n_hidden = [n_hidden] * (n_layers - 1)
        n_neurons = [n_in] + list(n_hidden) + [n_out]

    params = []
    for i in range(len(n_neurons) - 1):
        fan_in, fan_out = n_neurons[i], n_neurons[i + 1]
        key, sub = jax.random.split(key)
        limit = (6.0 / (fan_in + fan_out)) ** 0.5
        w = jax.random.uniform(sub, (fan_out, fan_in), dtype=dtype,
                               minval=-limit, maxval=limit)
        b = jnp.zeros((fan_out,), dtype=dtype)
        params.append((w, b))
    return params


def prepare_params(params, activation: str = "none", collapse: bool = True):
    """One-time prep (hoisted out of the forward path).

    * Transpose weights to [in, out] and reshape biases to (1, N).
    * If activation == "none" (module default) and collapse=True, fold the
      entire affine stack into a single (W_comb, b_comb) pair:
          x W1 + b1 -> (x W1 + b1) W2 + b2 = x (W1 W2) + (b1 W2 + b2)
      so the kernel runs one matmul + bias per tile instead of n_layers.
    """
    prep = []
    for w, b in params:
        w = jnp.asarray(w)
        b = jnp.asarray(b)
        prep.append((jnp.transpose(w), b.reshape(1, -1)))

    if collapse and activation == "none" and len(prep) > 1:
        wc, bc = prep[0]
        wc = wc.astype(jnp.float32)
        bc = bc.astype(jnp.float32)
        for wt, bt in prep[1:]:
            wt32 = wt.astype(jnp.float32)
            bc = bc @ wt32 + bt.astype(jnp.float32)
            wc = wc @ wt32
        prep = [(wc, bc)]
    return prep


# --------------------------------------------------------------------------
# Wrapper
# --------------------------------------------------------------------------
def _round_up(x, m):
    return (x + m - 1) // m * m


def _cores_per_chip() -> int:
    """Best-effort TensorCores-per-device count (2 on v4/v5p megacore, v7x)."""
    try:
        kind = jax.devices()[0].device_kind.lower()
    except Exception:
        return 1
    for tag in ("v4", "v5p", "v7", "7x", "tpu7"):
        if tag in kind:
            return 2
    return 1


def _choose_tm(m, n_in, itemsize, byte_budget, cores):
    """Byte-budgeted M tile: x tile ~= byte_budget bytes, 8-sublane aligned,
    never larger than the (8-aligned) batch; split into >=`cores` grid steps
    only when the device has multiple TensorCores and the batch allows it."""
    tm = max(8, (byte_budget // max(1, n_in * itemsize)) // 8 * 8)
    tm = min(tm, max(8, (m // 8) * 8))     # never exceed the array along M
    if cores > 1:
        steps = pl.cdiv(m, tm)
        if steps < cores and m > 8 * cores:
            tm = max(8, _round_up(pl.cdiv(m, cores), 8))
    return tm


def mlp_forward(x, prepared_params, *, activation: str = "none",
                byte_budget: int = 2 << 20, out_dtype=None, in_dtype=None):
    """Fused MLP forward: a single pallas_call evaluates every Dense layer.

    x: [..., n_in] (leading dims flattened like nn.Linear)
    prepared_params: output of prepare_params() — list of (W_t[in,out], b[1,out]).
    in_dtype / out_dtype: optional narrow I/O dtypes (e.g. jnp.bfloat16 on v5e)
    to halve HBM traffic; MXU accumulation stays f32 either way.
    """
    orig_shape = x.shape
    n_in = orig_shape[-1]
    x2 = x.reshape(-1, n_in)
    if in_dtype is not None:
        x2 = x2.astype(in_dtype)
    M = x2.shape[0]
    n_layers = len(prepared_params)
    n_out = prepared_params[-1][0].shape[1]
    if out_dtype is None:
        out_dtype = x.dtype

    # Only sub-sublane batches get padded (<= 7 rows); everything else relies
    # on Pallas partial-edge-block masking, so no full HBM copy of x.
    M_eff = M
    if M < 8:
        x2 = jnp.pad(x2, ((0, 8 - M), (0, 0)))
        M_eff = 8

    cores = _cores_per_chip()
    in_itemsize = x2.dtype.itemsize
    out_itemsize = jnp.dtype(out_dtype).itemsize
    tm = _choose_tm(M_eff, n_in, in_itemsize, byte_budget, cores)
    grid = pl.cdiv(M_eff, tm)

    # Cost estimate + VMEM budget (double-buffered x/out tiles, resident
    # weights, f32 intermediate headroom).
    flops = 0
    param_bytes = 0
    for w_t, b in prepared_params:
        k, n = w_t.shape
        flops += 2 * M * k * n
        param_bytes += w_t.size * w_t.dtype.itemsize + b.size * b.dtype.itemsize
    trans = 0
    if activation == "softplus" and n_layers > 1:
        trans = M * sum(w.shape[1] for w, _ in prepared_params[:-1])
    max_w = max([n_in] + [w.shape[1] for w, _ in prepared_params])
    live = (2 * tm * n_in * in_itemsize
            + 2 * tm * n_out * out_itemsize
            + param_bytes
            + 2 * tm * max_w * 4)
    vmem_limit = int(min(max(2 * live, 32 << 20), 48 << 20))

    kernel = functools.partial(_mlp_fused_kernel,
                               activation=activation, n_layers=n_layers)

    # x streams over M-tiles; all weights/biases are full-array VMEM residents
    # (constant index_map -> never re-fetched across grid steps).
    in_specs = [pl.BlockSpec((tm, n_in), lambda i: (i, 0))]
    flat_params = []
    for w_t, b in prepared_params:
        k, n = w_t.shape
        in_specs.append(pl.BlockSpec((k, n), lambda i: (0, 0)))
        in_specs.append(pl.BlockSpec((1, n), lambda i: (0, 0)))
        flat_params.append(w_t)
        flat_params.append(b)

    out = pl.pallas_call(
        kernel,
        out_shape=jax.ShapeDtypeStruct((M_eff, n_out), out_dtype),
        grid_spec=pltpu.PrefetchScalarGridSpec(
            num_scalar_prefetch=0,
            grid=(grid,),
            in_specs=in_specs,
            out_specs=pl.BlockSpec((tm, n_out), lambda i: (i, 0)),
        ),
        compiler_params=pltpu.CompilerParams(
            dimension_semantics=("parallel",),
            vmem_limit_bytes=vmem_limit),
        cost_estimate=pl.CostEstimate(
            flops=flops,
            transcendentals=trans,
            bytes_accessed=M * (n_in * in_itemsize + n_out * out_itemsize)
                           + param_bytes),
    )(x2, *flat_params)

    if M_eff != M:
        out = out[:M]
    return out.reshape(*orig_shape[:-1], n_out)
    # TODO(synk): dropout (train-mode only) is omitted; module default is dropout=False.


# --------------------------------------------------------------------------
# Self-test
# --------------------------------------------------------------------------
def _ref_mlp(x, params, activation="none"):
    h = x
    n = len(params)
    for i, (w, b) in enumerate(params):
        h = h @ w.T + b
        if i < n - 1:
            h = _apply_activation(h, activation)
    return h


if __name__ == "__main__":
    key = jax.random.PRNGKey(0)

    batch, n_in, n_out = 16, 32, 8             # n_neurons -> [32, 16, 8]
    kx, kp = jax.random.split(key)
    x = jax.random.normal(kx, (batch, n_in), dtype=jnp.float32)

    params = init_mlp_params(kp, n_in, n_out)  # defaults: n_hidden=None, n_layers=2

    # Default module path: activation=None -> layers collapse to one affine map.
    prep_none = prepare_params(params, activation="none")
    out = jax.block_until_ready(mlp_forward(x, prep_none, activation="none"))
    ref = _ref_mlp(x, params, activation="none")
    assert out.shape == (batch, n_out)
    assert jnp.allclose(out, ref, atol=1e-4, rtol=1e-4)

    # Non-multiple-of-8 batch exercises the partial edge block (no wrapper pad).
    x_odd = jax.random.normal(kx, (13, n_in), dtype=jnp.float32)
    out_odd = jax.block_until_ready(mlp_forward(x_odd, prep_none, activation="none"))
    ref_odd = _ref_mlp(x_odd, params, activation="none")
    assert out_odd.shape == (13, n_out)
    assert jnp.allclose(out_odd, ref_odd, atol=1e-4, rtol=1e-4)

    # Hidden-layer activation path (relu): no collapse, per-layer fused loop.
    prep_relu = prepare_params(params, activation="relu")
    out_relu = jax.block_until_ready(mlp_forward(x, prep_relu, activation="relu"))
    ref_relu = _ref_mlp(x, params, activation="relu")
    assert jnp.allclose(out_relu, ref_relu, atol=1e-4, rtol=1e-4)

    print("KERNEL_OK")
</pallas_src>

<mosaic_0001>
module attributes {stable_mosaic.version = 11 : i64} {
  func.func @_mlp_fused_kernel(%arg0: i32, %arg1: memref<16x32xf32, #tpu.memory_space<vmem>>, %arg2: memref<32x8xf32, #tpu.memory_space<vmem>>, %arg3: memref<1x8xf32, #tpu.memory_space<vmem>>, %arg4: memref<16x8xf32, #tpu.memory_space<vmem>>) attributes {dimension_semantics = [#tpu.dimension_semantics<parallel>], iteration_bounds = array<i64: 1>, scalar_prefetch = 0 : i64, scratch_operands = 0 : i64, tpu.core_type = #tpu.core_type<tc>, window_params = [{transform_indices = @transform_0, window_bounds = array<i64: 16, 32>}, {pipeline_mode = #tpu.pipeline_mode<synchronous>, transform_indices = @transform_1, window_bounds = array<i64: 32, 8>}, {pipeline_mode = #tpu.pipeline_mode<synchronous>, transform_indices = @transform_2, window_bounds = array<i64: 1, 8>}, {transform_indices = @transform_3, window_bounds = array<i64: 16, 8>}]} {
    %c0 = arith.constant 0 : index
    %c0_0 = arith.constant 0 : index
    %0 = vector.load %arg1[%c0, %c0_0] : memref<16x32xf32, #tpu.memory_space<vmem>>, vector<16x32xf32>
    %c0_1 = arith.constant 0 : index
    %c0_2 = arith.constant 0 : index
    %1 = vector.load %arg2[%c0_1, %c0_2] : memref<32x8xf32, #tpu.memory_space<vmem>>, vector<32x8xf32>
    %c0_3 = arith.constant 0 : index
    %c0_4 = arith.constant 0 : index
    %2 = vector.load %arg3[%c0_3, %c0_4] : memref<1x8xf32, #tpu.memory_space<vmem>>, vector<1x8xf32>
    %cst = arith.constant dense<0.000000e+00> : vector<16x8xf32>
    %3 = tpu.matmul %0, %1, %cst {dimension_numbers = #tpu.dot_dimension_numbers<[1], [0], [0], [1], [0, 0, 1, 1], [], []>} : vector<16x32xf32>, vector<32x8xf32>, vector<16x8xf32> -> vector<16x8xf32>
    %4 = vector.broadcast %2 : vector<1x8xf32> to vector<16x8xf32>
    %5 = arith.addf %3, %4 : vector<16x8xf32>
    %c0_5 = arith.constant 0 : index
    %c0_6 = arith.constant 0 : index
    %6 = vector.load %arg4[%c0_5, %c0_6] : memref<16x8xf32, #tpu.memory_space<vmem>>, vector<16x8xf32>
    tpu.vector_store %arg4[%c0_5, %c0_6], %5 {strides = array<i32>} : memref<16x8xf32, #tpu.memory_space<vmem>>, vector<16x8xf32>,
    return
  }
  func.func @transform_0(%arg0: i32) -> (i32, i32) {
    %c0_i32 = arith.constant 0 : i32
    %c0_i32_0 = arith.constant 0 : i32
    return %arg0, %c0_i32 : i32, i32
  }
  func.func @transform_1(%arg0: i32) -> (i32, i32) {
    %c0_i32 = arith.constant 0 : i32
    %c0_i32_0 = arith.constant 0 : i32
    %c0_i32_1 = arith.constant 0 : i32
    return %c0_i32, %c0_i32_0 : i32, i32
  }
  func.func @transform_2(%arg0: i32) -> (i32, i32) {
    %c0_i32 = arith.constant 0 : i32
    %c0_i32_0 = arith.constant 0 : i32
    %c0_i32_1 = arith.constant 0 : i32
    return %c0_i32, %c0_i32_0 : i32, i32
  }
  func.func @transform_3(%arg0: i32) -> (i32, i32) {
    %c0_i32 = arith.constant 0 : i32
    %c0_i32_0 = arith.constant 0 : i32
    return %arg0, %c0_i32 : i32, i32
  }
}

</mosaic_0001>

<llo_original>
// kernel: tpu_custom_call.1
$region0: #{tpu_custom_call.1}
  #allocation0 [shape = 'u32[]', space=smem, size = 0x4, offset = 0x4, fixed_abs, tag = 'smem constant byte address 0x4 - core index']
  #allocation1 [shape = 'u32[144,128]{1,0:T(1,128)}', space=vmem, size = 0x12000, scoped, tag = 'internal scratch']
  %s0 = inlined_call_operand.vmem [shape: f32[16,32], index: 0, kind: input, shape index: {}]
  %s1 = inlined_call_operand.vmem [shape: f32[32,8], index: 1, kind: input, shape index: {}]
  %s2 = inlined_call_operand.vmem [shape: f32[1,8], index: 2, kind: input, shape index: {}]
  %s3 = inlined_call_operand.vmem [shape: f32[16,8], index: 3, kind: output, shape index: {}]
  %s4 = sld [smem:[#allocation0]]
  $region22: #{tpu_custom_call.1} parent=0
    _
  %s6 = ssub.s32 1, %s4
  %s7 = scalar_select 0, %s6, %s4
  // Predicated region
  $region2: #{tpu_custom_call.1} parent=0 // pred_check
    _
  $region3: #{tpu_custom_call.1} parent=0 // pred_check_branch
    %9 = sbr.rel (0) target = $region5
  $region4: #{tpu_custom_call.1} parent=0 // pred_region
    _
  $region5: #{tpu_custom_call.1} parent=0 // pred_fallthru
    _
  // Predicated region
  $region6: #{tpu_custom_call.1} parent=0 // pred_check
    _
  $region7: #{tpu_custom_call.1} parent=0 // pred_check_branch
    %11 = sbr.rel (0) target = $region9
  $region8: #{tpu_custom_call.1} parent=0 // pred_region
    _
  $region9: #{tpu_custom_call.1} parent=0 // pred_fallthru
    _
  // Predicated region
  $region10: #{tpu_custom_call.1} parent=0 // pred_check
    _
  $region11: #{tpu_custom_call.1} parent=0 // pred_check_branch
    %13 = sbr.rel (0) target = $region13
  $region12: #{tpu_custom_call.1} parent=0 // pred_region
    _
  $region13: #{tpu_custom_call.1} parent=0 // pred_fallthru
    _
  %v14 = vld [vmem:[%s0] sm:$0xff]
  %v15 = vld [vmem:[%s0 + $0x8] sm:$0xff]
  %v16 = vld [vmem:[%s1] sm:$0xff]
  %v17 = vld [vmem:[%s1 + $0x8] sm:$0xff]
  %v18 = vld [vmem:[%s1 + $0x10] sm:$0xff]
  %v19 = vld [vmem:[%s1 + $0x18] sm:$0xff]
  %v20 = vld [vmem:[%s2] sm:$0x1]
  %v22 = vlaneseq
  %v23 = vshrl.u32 %v22, 7
  %v24 = vsub.s32 0, %v23
  %v25 = vrot.slane %v20, %v24
  %vm27 = vcmask 261120
  %v29 = vsel %vm27, %v14, 0
  %v32 = vsel %vm27, %v15, 0
  %34 = vmatprep.subr.mxu0 0.0
  %35 = vmatpush1.msra.mxu0 %v16
  %36 = vmatprep.subr.mxu0 0.0
  %37 = vmatpush1.msra.mxu0 %v17
  %38 = vmatprep.subr.mxu0 0.0
  %39 = vmatpush1.msra.mxu0 %v18
  %40 = vmatprep.subr.mxu0 0.0
  %41 = vmatpush1.msra.mxu0 %v19
  %42 = vmatprep.subr.mxu0 0.0
  %43 = vmatpush1.msra.mxu0 0.0
  %44 = vmatprep.subr.mxu0 0.0
  %45 = vmatpush1.msra.mxu0 0.0
  %46 = vmatprep.subr.mxu0 0.0
  %47 = vmatpush1.msra.mxu0 0.0
  %48 = vmatprep.subr.mxu0 0.0
  %49 = vmatpush1.msra.mxu0 0.0
  %50 = vmatprep.subr.mxu0 0.0
  %51 = vmatpush1.msra.mxu0 0.0
  %52 = vmatprep.subr.mxu0 0.0
  %53 = vmatpush1.msra.mxu0 0.0
  %54 = vmatprep.subr.mxu0 0.0
  %55 = vmatpush1.msra.mxu0 0.0
  %56 = vmatprep.subr.mxu0 0.0
  %57 = vmatpush1.msra.mxu0 0.0
  %58 = vmatprep.subr.mxu0 0.0
  %59 = vmatpush1.msra.mxu0 0.0
  %60 = vmatprep.subr.mxu0 0.0
  %61 = vmatpush1.msra.mxu0 0.0
  %62 = vmatprep.subr.mxu0 0.0
  %63 = vmatpush1.msra.mxu0 0.0
  %64 = vmatprep.subr.mxu0 0.0
  %65 = vmatpush1.msra.mxu0 0.0
  %66 = vmatprep.subr.mxu0 0.0
  %67 = vmatpush1.msra.mxu0 0.0
  %68 = vmatprep.subr.mxu0 0.0
  %69 = vmatpush1.msra.mxu0 0.0
  %70 = vmatprep.subr.mxu0 0.0
  %71 = vmatpush1.msra.mxu0 0.0
  %72 = vmatprep.subr.mxu0 0.0
  %73 = vmatpush1.msra.mxu0 0.0
  %74 = vmatprep.subr.mxu0 0.0
  %75 = vmatpush1.msra.mxu0 0.0
  %76 = vmatprep.subr.mxu0 0.0
  %77 = vmatpush1.msra.mxu0 0.0
  %78 = vmatprep.subr.mxu0 0.0
  %79 = vmatpush1.msra.mxu0 0.0
  %80 = vmatprep.subr.mxu0 0.0
  %81 = vmatpush1.msra.mxu0 0.0
  %82 = vmatprep.subr.mxu0 0.0
  %83 = vmatpush1.msra.mxu0 0.0
  %84 = vmatprep.subr.mxu0 0.0
  %85 = vmatpush1.msra.mxu0 0.0
  %86 = vmatprep.subr.mxu0 0.0
  %87 = vmatpush1.msra.mxu0 0.0
  %88 = vmatprep.subr.mxu0 0.0
  %89 = vmatpush1.msra.mxu0 0.0
  %90 = vmatprep.subr.mxu0 0.0
  %91 = vmatpush1.msra.mxu0 0.0
  %92 = vmatprep.subr.mxu0 0.0
  %93 = vmatpush1.msra.mxu0 0.0
  %94 = vmatprep.subr.mxu0 0.0
  %95 = vmatpush1.msra.mxu0 0.0
  %96 = vmatprep.subr.mxu0 0.0
  %97 = vmatpush1.msra.mxu0 0.0
  %98 = vmatprep.mubr.f32.mxu0 0.0
  %99 = vmatmul.mubr.f32.gmra.mrb[0].mxu0 %v29
  %v100 = vpop.f32.mrb[0].mxu0
  %v101 = vadd.f32 %v25, %v100
  %v102 = vpop.f32.mrb[0].mxu0
  %103 = vmatprep.mubr.f32.mxu0 0.0
  %104 = vmatmul.mubr.f32.gmra.mrb[0].mxu0 %v32
  %v105 = vpop.f32.mrb[0].mxu0
  %v106 = vadd.f32 %v25, %v105
  %v107 = vpop.f32.mrb[0].mxu0
  %108 = vdwg.mxu0
  %vm109 = vcmask 64512
  %110 = vst.msk [vmem:[%s3] sm:$0xff] %vm109, %v101
  %111 = vst.msk [vmem:[%s3 + $0x8] sm:$0xff] %vm109, %v106
  // Predicated region
  $region14: #{tpu_custom_call.1} parent=0 // pred_check
    _
  $region15: #{tpu_custom_call.1} parent=0 // pred_check_branch
    %113 = sbr.rel (0) target = $region17
  $region16: #{tpu_custom_call.1} parent=0 // pred_region
    _
  $region17: #{tpu_custom_call.1} parent=0 // pred_fallthru
    _
  // Predicated region
  $region18: #{tpu_custom_call.1} parent=0 // pred_check
    _
  $region19: #{tpu_custom_call.1} parent=0 // pred_check_branch
    %115 = sbr.rel (0) target = $region21
  $region20: #{tpu_custom_call.1} parent=0 // pred_region
    _
  $region21: #{tpu_custom_call.1} parent=0 // pred_fallthru
    _

</llo_original>
